<compile_context>
chip_gen: v5e
topology: v5e:2x2
jax: 0.10.0
libtpu: 0.0.40
codegen_flags: <defaults>
</compile_context>

<pallas_src>
import jax
import jax.numpy as jnp
from jax.experimental import pallas as pl
from jax.experimental.pallas import tpu as pltpu  # noqa: F401  (TPU backend)

HIDDEN = 32     # seed / hidden width
OUT = 3         # RGB
OUT_PAD = 128   # lane-padded output width for the kernel


def _softplus(x):
    # Match torch.nn.functional.softplus (beta=1, threshold=20):
    # returns x when x > 20, else log(1 + exp(x)).
    return jnp.where(x > 20.0, x, jnp.log1p(jnp.exp(jnp.minimum(x, 20.0))))


def color_calib_kernel(seed_ref, w1_ref, b1_ref, w2_ref, b2_ref, o_ref):
    """Computes softplus(Linear(ReLU(Linear(seed)))) for the single seed row.

    seed_ref: (1, HIDDEN)        f32
    w1_ref:   (HIDDEN, HIDDEN)   f32   (in, out) layout
    b1_ref:   (1, HIDDEN)        f32
    w2_ref:   (HIDDEN, OUT_PAD)  f32   (in, out) layout, cols >= OUT are zero
    b2_ref:   (1, OUT_PAD)       f32   cols >= OUT are zero
    o_ref:    (1, OUT_PAD)       f32   single lane-dense row (no batch broadcast)
    """
    # Linear(32, 32) + ReLU
    h = jnp.dot(seed_ref[...], w1_ref[...],
                preferred_element_type=jnp.float32) + b1_ref[...]
    h = jnp.maximum(h, 0.0)
    # Linear(32, 3) (lane-padded to OUT_PAD)
    y = jnp.dot(h, w2_ref[...],
                preferred_element_type=jnp.float32) + b2_ref[...]
    # softplus; the batch repeat happens outside the kernel.
    o_ref[...] = _softplus(y)                           # (1, OUT_PAD)


def prepare_params(params):
    """One-time parameter plumbing (transpose + lane padding). Cache the result."""
    seed, w1, b1, w2, b2 = params   # torch shapes: (32,), (32,32), (32,), (3,32), (3,)
    seed2 = seed.reshape(1, HIDDEN).astype(jnp.float32)
    w1t = w1.T.astype(jnp.float32)                                    # (in=32, out=32)
    b1r = b1.reshape(1, HIDDEN).astype(jnp.float32)
    w2t = jnp.zeros((HIDDEN, OUT_PAD), jnp.float32).at[:, :OUT].set(w2.T)
    b2r = jnp.zeros((1, OUT_PAD), jnp.float32).at[:, :OUT].set(b2)
    return seed2, w1t, b1r, w2t, b2r


def color_calib_net(prepped, batch_size: int):
    """JAX wrapper: single-row Pallas kernel + fusible broadcast. Returns (batch_size, 3)."""
    seed2, w1t, b1r, w2t, b2r = prepped

    cost = pl.CostEstimate(
        flops=2 * HIDDEN * HIDDEN + 2 * HIDDEN * OUT_PAD,   # two tiny matmuls
        transcendentals=OUT_PAD,                            # exp in softplus
        bytes_accessed=4 * (HIDDEN                          # seed
                            + HIDDEN * HIDDEN + HIDDEN      # w1, b1
                            + HIDDEN * OUT_PAD + OUT_PAD    # w2, b2
                            + OUT_PAD),                     # output row
    )

    sp_row = pl.pallas_call(
        color_calib_kernel,
        out_shape=jax.ShapeDtypeStruct((1, OUT_PAD), jnp.float32),
        grid=(1,),
        in_specs=[
            pl.BlockSpec((1, HIDDEN), lambda i: (0, 0)),
            pl.BlockSpec((HIDDEN, HIDDEN), lambda i: (0, 0)),
            pl.BlockSpec((1, HIDDEN), lambda i: (0, 0)),
            pl.BlockSpec((HIDDEN, OUT_PAD), lambda i: (0, 0)),
            pl.BlockSpec((1, OUT_PAD), lambda i: (0, 0)),
        ],
        out_specs=pl.BlockSpec((1, OUT_PAD), lambda i: (0, 0)),
        cost_estimate=cost,
    )(seed2, w1t, b1r, w2t, b2r)

    # Slice the 3 useful lanes of the single row, then broadcast across the
    # batch ("repeat") outside the kernel; XLA fuses this into consumers.
    rgb = sp_row[0, :OUT]                                   # (3,)
    return jnp.broadcast_to(rgb[None, :], (batch_size, OUT))


def init_params(key):
    """Deterministic synthetic parameters with the module's shapes."""
    k_seed, k_w1, k_b1, k_w2, k_b2 = jax.random.split(key, 5)
    seed = jax.random.normal(k_seed, (HIDDEN,), jnp.float32)           # nn.Parameter(randn(32))
    w1 = jax.random.normal(k_w1, (HIDDEN, HIDDEN), jnp.float32) * 0.1  # Linear(32,32).weight
    b1 = jax.random.normal(k_b1, (HIDDEN,), jnp.float32) * 0.1         # Linear(32,32).bias
    w2 = jax.random.normal(k_w2, (OUT, HIDDEN), jnp.float32) * 0.1     # Linear(32,3).weight
    b2 = jax.random.normal(k_b2, (OUT,), jnp.float32) * 0.1            # Linear(32,3).bias
    return seed, w1, b1, w2, b2


def reference(params, batch_size: int):
    """Pure-JAX reference of the PyTorch forward."""
    seed, w1, b1, w2, b2 = params
    h = jnp.maximum(seed @ w1.T + b1, 0.0)
    y = h @ w2.T + b2
    rgb = _softplus(y)
    return jnp.broadcast_to(rgb[None, :], (batch_size, OUT))


if __name__ == "__main__":
    key = jax.random.PRNGKey(0)
    params = init_params(key)
    prepped = prepare_params(params)   # done once; weights stay cached

    batch_size = 2
    out = color_calib_net(prepped, batch_size)
    out = jax.block_until_ready(out)

    ref = reference(params, batch_size)
    assert out.shape == (batch_size, OUT), out.shape
    assert jnp.allclose(out, ref, atol=1e-5, rtol=1e-5), (out, ref)

    print("KERNEL_OK")
</pallas_src>

<mosaic_0001>
module attributes {stable_mosaic.version = 11 : i64} {
  func.func @color_calib_kernel(%arg0: i32, %arg1: memref<1x32xf32, #tpu.memory_space<vmem>>, %arg2: memref<32x32xf32, #tpu.memory_space<vmem>>, %arg3: memref<1x32xf32, #tpu.memory_space<vmem>>, %arg4: memref<32x128xf32, #tpu.memory_space<vmem>>, %arg5: memref<1x128xf32, #tpu.memory_space<vmem>>, %arg6: memref<1x128xf32, #tpu.memory_space<vmem>>) attributes {dimension_semantics = [#tpu.dimension_semantics<arbitrary>], iteration_bounds = array<i64: 1>, scalar_prefetch = 0 : i64, scratch_operands = 0 : i64, tpu.core_type = #tpu.core_type<tc>, window_params = [{pipeline_mode = #tpu.pipeline_mode<synchronous>, transform_indices = @transform_0, window_bounds = array<i64: 1, 32>}, {pipeline_mode = #tpu.pipeline_mode<synchronous>, transform_indices = @transform_1, window_bounds = array<i64: 32, 32>}, {pipeline_mode = #tpu.pipeline_mode<synchronous>, transform_indices = @transform_2, window_bounds = array<i64: 1, 32>}, {pipeline_mode = #tpu.pipeline_mode<synchronous>, transform_indices = @transform_3, window_bounds = array<i64: 32, 128>}, {pipeline_mode = #tpu.pipeline_mode<synchronous>, transform_indices = @transform_4, window_bounds = array<i64: 1, 128>}, {pipeline_mode = #tpu.pipeline_mode<synchronous>, transform_indices = @transform_5, window_bounds = array<i64: 1, 128>}]} {
    %c0 = arith.constant 0 : index
    %c0_0 = arith.constant 0 : index
    %0 = vector.load %arg1[%c0, %c0_0] : memref<1x32xf32, #tpu.memory_space<vmem>>, vector<1x32xf32>
    %c0_1 = arith.constant 0 : index
    %c0_2 = arith.constant 0 : index
    %1 = vector.load %arg2[%c0_1, %c0_2] : memref<32x32xf32, #tpu.memory_space<vmem>>, vector<32x32xf32>
    %cst = arith.constant dense<0.000000e+00> : vector<1x32xf32>
    %2 = tpu.matmul %0, %1, %cst {dimension_numbers = #tpu.dot_dimension_numbers<[1], [0], [0], [1], [0, 0, 1, 1], [], []>} : vector<1x32xf32>, vector<32x32xf32>, vector<1x32xf32> -> vector<1x32xf32>
    %c0_3 = arith.constant 0 : index
    %c0_4 = arith.constant 0 : index
    %3 = vector.load %arg3[%c0_3, %c0_4] : memref<1x32xf32, #tpu.memory_space<vmem>>, vector<1x32xf32>
    %4 = arith.addf %2, %3 : vector<1x32xf32>
    %cst_5 = arith.constant 0.000000e+00 : f32
    %5 = vector.broadcast %cst_5 : f32 to vector<1x32xf32>
    %6 = arith.maximumf %4, %5 : vector<1x32xf32>
    %c0_6 = arith.constant 0 : index
    %c0_7 = arith.constant 0 : index
    %7 = vector.load %arg4[%c0_6, %c0_7] : memref<32x128xf32, #tpu.memory_space<vmem>>, vector<32x128xf32>
    %cst_8 = arith.constant dense<0.000000e+00> : vector<1x128xf32>
    %8 = tpu.matmul %6, %7, %cst_8 {dimension_numbers = #tpu.dot_dimension_numbers<[1], [0], [0], [1], [0, 0, 1, 1], [], []>} : vector<1x32xf32>, vector<32x128xf32>, vector<1x128xf32> -> vector<1x128xf32>
    %c0_9 = arith.constant 0 : index
    %c0_10 = arith.constant 0 : index
    %9 = vector.load %arg5[%c0_9, %c0_10] : memref<1x128xf32, #tpu.memory_space<vmem>>, vector<1x128xf32>
    %10 = arith.addf %8, %9 : vector<1x128xf32>
    %cst_11 = arith.constant 2.000000e+01 : f32
    %11 = vector.broadcast %cst_11 : f32 to vector<1x128xf32>
    %12 = arith.cmpf ogt, %10, %11 : vector<1x128xf32>
    %cst_12 = arith.constant 2.000000e+01 : f32
    %13 = vector.broadcast %cst_12 : f32 to vector<1x128xf32>
    %14 = arith.minimumf %10, %13 : vector<1x128xf32>
    %15 = math.exp %14 : vector<1x128xf32>
    %16 = math.log1p %15 : vector<1x128xf32>
    %17 = arith.select %12, %10, %16 : vector<1x128xi1>, vector<1x128xf32>
    %c0_13 = arith.constant 0 : index
    %c0_14 = arith.constant 0 : index
    %18 = vector.load %arg6[%c0_13, %c0_14] : memref<1x128xf32, #tpu.memory_space<vmem>>, vector<1x128xf32>
    tpu.vector_store %arg6[%c0_13, %c0_14], %17 {strides = array<i32>} : memref<1x128xf32, #tpu.memory_space<vmem>>, vector<1x128xf32>,
    return
  }
  func.func @transform_0(%arg0: i32) -> (i32, i32) {
    %c0_i32 = arith.constant 0 : i32
    %c0_i32_0 = arith.constant 0 : i32
    %c0_i32_1 = arith.constant 0 : i32
    return %c0_i32, %c0_i32_0 : i32, i32
  }
  func.func @transform_1(%arg0: i32) -> (i32, i32) {
    %c0_i32 = arith.constant 0 : i32
    %c0_i32_0 = arith.constant 0 : i32
    %c0_i32_1 = arith.constant 0 : i32
    return %c0_i32, %c0_i32_0 : i32, i32
  }
  func.func @transform_2(%arg0: i32) -> (i32, i32) {
    %c0_i32 = arith.constant 0 : i32
    %c0_i32_0 = arith.constant 0 : i32
    %c0_i32_1 = arith.constant 0 : i32
    return %c0_i32, %c0_i32_0 : i32, i32
  }
  func.func @transform_3(%arg0: i32) -> (i32, i32) {
    %c0_i32 = arith.constant 0 : i32
    %c0_i32_0 = arith.constant 0 : i32
    %c0_i32_1 = arith.constant 0 : i32
    return %c0_i32, %c0_i32_0 : i32, i32
  }
  func.func @transform_4(%arg0: i32) -> (i32, i32) {
    %c0_i32 = arith.constant 0 : i32
    %c0_i32_0 = arith.constant 0 : i32
    %c0_i32_1 = arith.constant 0 : i32
    return %c0_i32, %c0_i32_0 : i32, i32
  }
  func.func @transform_5(%arg0: i32) -> (i32, i32) {
    %c0_i32 = arith.constant 0 : i32
    %c0_i32_0 = arith.constant 0 : i32
    %c0_i32_1 = arith.constant 0 : i32
    return %c0_i32, %c0_i32_0 : i32, i32
  }
}

</mosaic_0001>

<llo_original>
// kernel: tpu_custom_call.1
$region0: #{tpu_custom_call.1}
  #allocation0 [shape = 'u32[]', space=smem, size = 0x4, offset = 0x4, fixed_abs, tag = 'smem constant byte address 0x4 - core index']
  #allocation1 [shape = 'u32[72,128]{1,0:T(1,128)}', space=vmem, size = 0x9000, scoped, tag = 'internal scratch']
  %s0 = inlined_call_operand.hbm [shape: f32[1,32], index: 0, kind: input, shape index: {}]
  %s1 = inlined_call_operand.hbm [shape: f32[32,32], index: 1, kind: input, shape index: {}]
  %s2 = inlined_call_operand.vmem [shape: f32[1,32], index: 2, kind: input, shape index: {}]
  %s3 = inlined_call_operand.hbm [shape: f32[32,128], index: 3, kind: input, shape index: {}]
  %s4 = inlined_call_operand.vmem [shape: f32[1,128], index: 4, kind: input, shape index: {}]
  %s5 = inlined_call_operand.hbm [shape: f32[1,128], index: 5, kind: output, shape index: {}]
  %s6 = sld [smem:[#allocation0]]
  $region42: #{tpu_custom_call.1} parent=0
    _
  %s8 = ssub.s32 1, %s6
  %s9 = scalar_select 0, %s8, %s6
  $region1: #{tpu_custom_call.1} parent=0
    #allocation2 [shape = 'u8[512]{0}', space=vmem, size = 0x400, scoped, tag = 'input window, operand 0, single buffered']
    #allocation3 [shape = 's32[1]{0}', space=sflag, size = 0x4, scoped, tag = 'scoped memory for tpu_custom_call.1']
    #allocation4 [shape = 's32[1]{0}', space=sflag, size = 0x4, scoped, tag = 'scoped memory for tpu_custom_call.1']
    #allocation5 [shape = 'u8[16384]{0}', space=vmem, size = 0x4000, scoped, tag = 'input window, operand 1, single buffered']
    #allocation6 [shape = 's32[1]{0}', space=sflag, size = 0x4, scoped, tag = 'scoped memory for tpu_custom_call.1']
    #allocation7 [shape = 'u8[16384]{0}', space=vmem, size = 0x4000, scoped, tag = 'input window, operand 3, single buffered']
    #allocation8 [shape = 'u8[512]{0}', space=vmem, size = 0x400, scoped, tag = 'output window, operand 0, single buffered']
    %10 = vsyncpa [#allocation3], 0
    %11 = vsyncpa [#allocation6], 0
    %12 = vsyncpa [#allocation4], 0
    // Predicated region
    $region2: #{tpu_custom_call.1} parent=1 // pred_check
      _
    $region3: #{tpu_custom_call.1} parent=1 // pred_check_branch
      %14 = sbr.rel (0) target = $region5
    $region4: #{tpu_custom_call.1} parent=1 // pred_region
      %16 = vsyncadd [#allocation3], 0
      %s18 = sshll.u32 %s0, 4
      %s19 = int_to_ptr.hbm [resolvable:$true] %s18
      %s20 = sshll.u32 [#allocation2], 4
      %s21 = int_to_ptr.vmem [resolvable:$true] %s20
      %23 = dma.hbm_to_vmem [thread:$0]  %s19, 16, %s21, [#allocation3]
    $region5: #{tpu_custom_call.1} parent=1 // pred_fallthru
      _
    // Predicated region
    $region6: #{tpu_custom_call.1} parent=1 // pred_check
      _
    $region7: #{tpu_custom_call.1} parent=1 // pred_check_branch
      %25 = sbr.rel (0) target = $region9
    $region8: #{tpu_custom_call.1} parent=1 // pred_region
      %27 = vsyncadd [#allocation6], 0
      %s28 = sshll.u32 %s1, 4
      %s29 = int_to_ptr.hbm [resolvable:$true] %s28
      %s30 = sshll.u32 [#allocation5], 4
      %s31 = int_to_ptr.vmem [resolvable:$true] %s30
      %36 = dma.hbm_to_vmem [thread:$0]  %s29, 512, %s31, [#allocation6], 128, 128, 8
    $region9: #{tpu_custom_call.1} parent=1 // pred_fallthru
      _
    // Predicated region
    $region10: #{tpu_custom_call.1} parent=1 // pred_check
      _
    $region11: #{tpu_custom_call.1} parent=1 // pred_check_branch
      %38 = sbr.rel (0) target = $region13
    $region12: #{tpu_custom_call.1} parent=1 // pred_region
      _
    $region13: #{tpu_custom_call.1} parent=1 // pred_fallthru
      _
    // Predicated region
    $region14: #{tpu_custom_call.1} parent=1 // pred_check
      _
    $region15: #{tpu_custom_call.1} parent=1 // pred_check_branch
      %40 = sbr.rel (0) target = $region17
    $region16: #{tpu_custom_call.1} parent=1 // pred_region
      %42 = vsyncadd [#allocation6], 0
      %s43 = sshll.u32 %s3, 4
      %s44 = int_to_ptr.hbm [resolvable:$true] %s43
      %s45 = sshll.u32 [#allocation7], 4
      %s46 = int_to_ptr.vmem [resolvable:$true] %s45
      %51 = dma.hbm_to_vmem [thread:$0]  %s44, 512, %s46, [#allocation6], 128, 128, 8
    $region17: #{tpu_custom_call.1} parent=1 // pred_fallthru
      _
    // Predicated region
    $region18: #{tpu_custom_call.1} parent=1 // pred_check
      _
    $region19: #{tpu_custom_call.1} parent=1 // pred_check_branch
      %53 = sbr.rel (0) target = $region21
    $region20: #{tpu_custom_call.1} parent=1 // pred_region
      _
    $region21: #{tpu_custom_call.1} parent=1 // pred_fallthru
      _
    // Predicated region
    $region22: #{tpu_custom_call.1} parent=1 // pred_check
      _
    $region23: #{tpu_custom_call.1} parent=1 // pred_check_branch
      %55 = sbr.rel (0) target = $region25
    $region24: #{tpu_custom_call.1} parent=1 // pred_region
      %57 = dma.done [#allocation3], 16
    $region25: #{tpu_custom_call.1} parent=1 // pred_fallthru
      _
    // Predicated region
    $region26: #{tpu_custom_call.1} parent=1 // pred_check
      _
    $region27: #{tpu_custom_call.1} parent=1 // pred_check_branch
      %59 = sbr.rel (0) target = $region29
    $region28: #{tpu_custom_call.1} parent=1 // pred_region
      %61 = dma.done [#allocation6], 512
    $region29: #{tpu_custom_call.1} parent=1 // pred_fallthru
      _
    // Predicated region
    $region30: #{tpu_custom_call.1} parent=1 // pred_check
      _
    $region31: #{tpu_custom_call.1} parent=1 // pred_check_branch
      %63 = sbr.rel (0) target = $region33
    $region32: #{tpu_custom_call.1} parent=1 // pred_region
      %65 = dma.done [#allocation6], 512
    $region33: #{tpu_custom_call.1} parent=1 // pred_fallthru
      _
    %v66 = vld [vmem:[#allocation2] sm:$0x1]
    %v67 = vld [vmem:[#allocation5] sm:$0xff]
    %v68 = vld [vmem:[#allocation5 + $0x8] sm:$0xff]
    %v69 = vld [vmem:[#allocation5 + $0x10] sm:$0xff]
    %v70 = vld [vmem:[#allocation5 + $0x18] sm:$0xff]
    %v71 = vld [vmem:[%s2] sm:$0x1]
    %vm72 = vcmask 261120
    %v74 = vsel %vm72, %v66, 0
    %76 = vmatpush.msra.mxu0 0.0
    %77 = vmatpush.msra.mxu0 0.0
    %78 = vmatpush.msra.mxu0 0.0
    %79 = vmatpush.msra.mxu0 0.0
    %80 = vmatpush.msra.mxu0 0.0
    %81 = vmatpush.msra.mxu0 0.0
    %82 = vmatpush.msra.mxu0 0.0
    %83 = vmatpush.msra.mxu0 0.0
    %84 = vmatpush.msra.mxu0 0.0
    %85 = vmatpush.msra.mxu0 0.0
    %86 = vmatpush.msra.mxu0 0.0
    %87 = vmatpush.msra.mxu0 0.0
    %88 = vmatpush.msra.mxu0 %v70
    %89 = vmatpush.msra.mxu0 %v69
    %90 = vmatpush.msra.mxu0 %v68
    %91 = vmatpush.msra.mxu0 %v67
    %92 = vmatmul.f32.gmra.mxu0 %v74
    %v93 = vpop.f32.mrf.mxu0
    %v94 = vadd.f32 %v71, %v93
    %95 = vdwg.mxu0
    %v96 = vmax.f32 %v94, 0.0
    %v97 = vld [vmem:[#allocation7] sm:$0xff]
    %v98 = vld [vmem:[#allocation7 + $0x8] sm:$0xff]
    %v99 = vld [vmem:[#allocation7 + $0x10] sm:$0xff]
    %v100 = vld [vmem:[#allocation7 + $0x18] sm:$0xff]
    %v101 = vld [vmem:[%s4] sm:$0x1]
    %v103 = vsel %vm72, %v96, 0
    %105 = vmatpush.msra.mxu0 0.0
    %106 = vmatpush.msra.mxu0 0.0
    %107 = vmatpush.msra.mxu0 0.0
    %108 = vmatpush.msra.mxu0 0.0
    %109 = vmatpush.msra.mxu0 0.0
    %110 = vmatpush.msra.mxu0 0.0
    %111 = vmatpush.msra.mxu0 0.0
    %112 = vmatpush.msra.mxu0 0.0
    %113 = vmatpush.msra.mxu0 0.0
    %114 = vmatpush.msra.mxu0 0.0
    %115 = vmatpush.msra.mxu0 0.0
    %116 = vmatpush.msra.mxu0 0.0
    %117 = vmatpush.msra.mxu0 %v100
    %118 = vmatpush.msra.mxu0 %v99
    %119 = vmatpush.msra.mxu0 %v98
    %120 = vmatpush.msra.mxu0 %v97
    %121 = vmatmul.f32.gmra.mxu0 %v103
    %v122 = vpop.f32.mrf.mxu0
    %v123 = vadd.f32 %v101, %v122
    %124 = vdwg.mxu0
    %vm125 = vcmp.gt.f32.partialorder %v123, 20.0
    %v126 = vmin.f32 %v123, 20.0
    %v127 = vmul.f32 %v126, 1.442695
    %v128 = vpow.pop %v127
    %v129 = vadd.f32 %v128, 1.0
    %v130 = vlog2.pop %v129
    %v131 = vmul.f32 %v130, 0.6931472
    %v132 = vmul.f32 -0.5, %v128
    %v133 = vadd.f32 %v132, 1.0
    %v134 = vmul.f32 %v133, %v128
    %v135 = vand.u32 2147483647, %v128
    %vm136 = vcmp.lt.f32.partialorder %v135, 0.0004427343
    %v137 = vsel %vm136, %v134, %v131
    %v138 = vsel %vm125, %v123, %v137
    %139 = vst [vmem:[#allocation8] sm:$0x1] %v138
    // Predicated region
    $region34: #{tpu_custom_call.1} parent=1 // pred_check
      _
    $region35: #{tpu_custom_call.1} parent=1 // pred_check_branch
      %141 = sbr.rel (0) target = $region37
    $region36: #{tpu_custom_call.1} parent=1 // pred_region
      %143 = vsyncadd [#allocation4], 0
      %s145 = sshll.u32 [#allocation8], 4
      %s146 = int_to_ptr.vmem [resolvable:$true] %s145
      %s147 = sshll.u32 %s5, 4
      %s148 = int_to_ptr.hbm [resolvable:$true] %s147
      %150 = dma.vmem_to_hbm [thread:$0]  %s146, 16, %s148, [#allocation4]
    $region37: #{tpu_custom_call.1} parent=1 // pred_fallthru
      _
    // Predicated region
    $region38: #{tpu_custom_call.1} parent=1 // pred_check
      _
    $region39: #{tpu_custom_call.1} parent=1 // pred_check_branch
      %152 = sbr.rel (0) target = $region41
    $region40: #{tpu_custom_call.1} parent=1 // pred_region
      %154 = dma.done [#allocation4], 16
    $region41: #{tpu_custom_call.1} parent=1 // pred_fallthru
      _
    %155 = vsyncpa [#allocation3], 1
    %156 = vsyncpa [#allocation6], 1
    %157 = vsyncpa [#allocation4], 1

</llo_original>
